<compile_context>
chip_gen: v5e
topology: v5e:2x2
jax: 0.10.0
libtpu: 0.0.40
codegen_flags: <defaults>
</compile_context>

<pallas_src>
import numpy as np

import jax
import jax.numpy as jnp
from jax import lax
from jax.experimental import pallas as pl
from jax.experimental.pallas import tpu as pltpu


LANE = 128

_VMEM = pl.BlockSpec(memory_space=pltpu.MemorySpace.VMEM)
_SMEM = pl.BlockSpec(memory_space=pltpu.MemorySpace.SMEM)


def _round_up(x, m):
    return ((x + m - 1) // m) * m


def _pad2d(x, rows, cols):
    """Zero-pad a 2-D array up to (rows, cols)."""
    return jnp.pad(x, ((0, rows - x.shape[0]), (0, cols - x.shape[1])))


# ---------------------------------------------------------------------------
# Kernels (single invocation, grid-free)
# ---------------------------------------------------------------------------
def gcn_noattn_kernel(seq_ref, adj_ref, wfc_ref, bias_ref, alpha_ref, out_ref):
    """seq->fc (folded over batch), per-batch bmm(adj, fts) + bias, PReLU.

    seq_ref  : (B*N, Fin)  f32  VMEM
    adj_ref  : (B, N, N)   f32  VMEM
    wfc_ref  : (Fin, Fp)   mxu  VMEM   (Fp = Fout rounded up to 128, zero-padded)
    bias_ref : (1, Fp)     f32  VMEM   (zero-padded)
    alpha_ref: (1,)        f32  SMEM   (PReLU slope)
    out_ref  : (B*N, Fp)   f32  VMEM   (lane-dense; pad cols sliced off outside)
    """
    B, N, _ = adj_ref.shape
    dt = wfc_ref.dtype
    alpha = alpha_ref[0]
    bias = bias_ref[...]

    # One fc matmul for the whole folded batch (M = B*N rows per MXU push).
    seq_fts = jnp.dot(seq_ref[...].astype(dt), wfc_ref[...],
                      preferred_element_type=jnp.float32)           # (B*N, Fp)

    # Tiny batch -> statically unrolled; all slices are static.
    for b in range(B):
        fts_b = seq_fts[b * N:(b + 1) * N, :]                       # (N, Fp)
        h = jnp.dot(adj_ref[b].astype(dt), fts_b.astype(dt),
                    preferred_element_type=jnp.float32)             # (N, Fp)
        out = h + bias
        out_ref[b * N:(b + 1) * N, :] = jnp.where(out > 0, out, alpha * out)


def gcn_attn_kernel(seq_ref, adj_ref, mask_ref,
                    wfc_ref, wqk_ref, wv1_ref, wv2_ref,
                    bias_ref, alphas_ref,
                    out_ref, div_ref):
    """Full attention branch of GCN.forward(attn=True).

    seq_ref   : (B*N, Fin)   f32  VMEM
    adj_ref   : (B, N, N)    f32  VMEM
    mask_ref  : (B, N, N)    f32  VMEM   dropout keep-mask, pre-scaled by 1/(1-p)
    wfc_ref   : (Fin, Fp)    mxu  VMEM
    wqk_ref   : (Fp, 2*Fp)   mxu  VMEM   fused [to_q | to_k] weights
    wv1_ref   : (Fp, Fp)     mxu  VMEM
    wv2_ref   : (Fp, Fp)     mxu  VMEM
    bias_ref  : (1, Fp)      f32  VMEM
    alphas_ref: (2,)         f32  SMEM   [PReLU(act) slope, PReLU(to_v) slope]
    out_ref   : (B*N, Fp)    f32  VMEM
    div_ref   : (1, 1)       f32  VMEM   sum over (B,N) of ||qn-kn||^2 (mean in glue)
    """
    B, N, _ = adj_ref.shape
    Fp = wfc_ref.shape[1]
    dt = wfc_ref.dtype
    a_act = alphas_ref[0]
    a_v = alphas_ref[1]
    bias = bias_ref[...]

    # fc once for the whole folded batch.
    seq_fts = jnp.dot(seq_ref[...].astype(dt), wfc_ref[...],
                      preferred_element_type=jnp.float32)           # (B*N, Fp)

    div_acc = jnp.zeros((1, 1), jnp.float32)

    for b in range(B):
        adj_b = adj_ref[b]                                           # (N, N)
        fts_b = seq_fts[b * N:(b + 1) * N, :]                        # (N, Fp)

        # aggregation: bmm(adj, seq_fts) for this batch element
        h = jnp.dot(adj_b.astype(dt), fts_b.astype(dt),
                    preferred_element_type=jnp.float32)              # (N, Fp)
        h_dt = h.astype(dt)

        # fused q/k projection, then static lane-aligned split
        qk = jnp.dot(h_dt, wqk_ref[...],
                     preferred_element_type=jnp.float32)             # (N, 2*Fp)
        q = qk[:, :Fp]
        k = qk[:, Fp:]

        # F.normalize(dim=-1, eps=1e-12): x / max(||x||, eps)
        #   == x * rsqrt(max(||x||^2, eps^2));  rsqrt runs on the EUP.
        qn = q * lax.rsqrt(jnp.maximum(jnp.sum(q * q, -1, keepdims=True), 1e-24))
        kn = k * lax.rsqrt(jnp.maximum(jnp.sum(k * k, -1, keepdims=True), 1e-24))

        # div_loss partial: sum_n sum_d (qn - kn)^2   (zero pad cols contribute 0)
        diff = qn - kn
        div_acc = div_acc + jnp.sum(
            jnp.sum(diff * diff, axis=-1, keepdims=True), axis=0, keepdims=True)

        # attention scores: einsum('md,nd->mn')
        scores = lax.dot_general(qn.astype(dt), kn.astype(dt),
                                 (((1,), (1,)), ((), ())),
                                 preferred_element_type=jnp.float32)  # (N, N)

        # masked softmax over last dim (EUP reciprocal for the denominator)
        att = jnp.where(adj_b > 0, scores, -9e15)
        att = att - jnp.max(att, axis=-1, keepdims=True)
        e = jnp.exp(att)
        att = e * pl.reciprocal(jnp.sum(e, axis=-1, keepdims=True), approx=True)

        # dropout (keep-mask already scaled by 1/(1-p) in wrapper glue)
        att = att * mask_ref[b]

        # context + to_v = Linear -> PReLU -> Linear, then bias + PReLU(act)
        ctx = jnp.dot(att.astype(dt), h_dt,
                      preferred_element_type=jnp.float32)            # (N, Fp)
        v1 = jnp.dot(ctx.astype(dt), wv1_ref[...],
                     preferred_element_type=jnp.float32)
        v1 = jnp.where(v1 > 0, v1, a_v * v1)
        v2 = jnp.dot(v1.astype(dt), wv2_ref[...],
                     preferred_element_type=jnp.float32)

        out = v2 + bias
        out_ref[b * N:(b + 1) * N, :] = jnp.where(out > 0, out, a_act * out)

    # Single tiny store per call (the call is grid-free).
    div_ref[...] = div_acc


# ---------------------------------------------------------------------------
# Wrappers (glue: padding/transposes/dtype prep + pallas_call plumbing)
# ---------------------------------------------------------------------------
def gcn_forward_noattn(seq, adj, w_fc, bias, alpha_act, *, mxu_dtype=jnp.bfloat16):
    B, N, Fin = seq.shape
    Fout = w_fc.shape[0]
    Fp = _round_up(Fout, LANE)
    f32 = jnp.float32

    seq2d = seq.reshape(B * N, Fin).astype(f32)
    adj_f = adj.astype(f32)
    wfc_t = _pad2d(w_fc.T.astype(f32), Fin, Fp).astype(mxu_dtype)
    bias2 = _pad2d(bias.reshape(1, Fout).astype(f32), 1, Fp)
    alpha = jnp.asarray(alpha_act, f32).reshape(1)

    out_pad = pl.pallas_call(
        gcn_noattn_kernel,
        out_shape=jax.ShapeDtypeStruct((B * N, Fp), f32),
        in_specs=[_VMEM, _VMEM, _VMEM, _VMEM, _SMEM],
        out_specs=_VMEM,
    )(seq2d, adj_f, wfc_t, bias2, alpha)

    return out_pad[:, :Fout].reshape(B, N, Fout)


def gcn_forward_attn(seq, adj, drop_mask, w_fc, w_q, w_k, w_v1, w_v2,
                     bias, alpha_act, alpha_v, *, mxu_dtype=jnp.bfloat16):
    B, N, Fin = seq.shape
    Fout = w_fc.shape[0]
    Fp = _round_up(Fout, LANE)
    f32 = jnp.float32

    seq2d = seq.reshape(B * N, Fin).astype(f32)
    adj_f = adj.astype(f32)
    mask_f = drop_mask.astype(f32)

    wfc_t = _pad2d(w_fc.T.astype(f32), Fin, Fp).astype(mxu_dtype)
    wq_t = _pad2d(w_q.T.astype(f32), Fp, Fp)
    wk_t = _pad2d(w_k.T.astype(f32), Fp, Fp)
    wqk_t = jnp.concatenate([wq_t, wk_t], axis=1).astype(mxu_dtype)   # (Fp, 2*Fp)
    wv1_t = _pad2d(w_v1.T.astype(f32), Fp, Fp).astype(mxu_dtype)
    wv2_t = _pad2d(w_v2.T.astype(f32), Fp, Fp).astype(mxu_dtype)
    bias2 = _pad2d(bias.reshape(1, Fout).astype(f32), 1, Fp)
    alphas = jnp.stack([jnp.asarray(alpha_act, f32),
                        jnp.asarray(alpha_v, f32)])                   # (2,)

    out_pad, div_partial = pl.pallas_call(
        gcn_attn_kernel,
        out_shape=(
            jax.ShapeDtypeStruct((B * N, Fp), f32),
            jax.ShapeDtypeStruct((1, 1), f32),
        ),
        in_specs=[_VMEM, _VMEM, _VMEM, _VMEM, _VMEM, _VMEM, _VMEM, _VMEM, _SMEM],
        out_specs=(_VMEM, _VMEM),
    )(seq2d, adj_f, mask_f, wfc_t, wqk_t, wv1_t, wv2_t, bias2, alphas)

    out = out_pad[:, :Fout].reshape(B, N, Fout)
    div_loss = div_partial[0, 0] / (B * N)      # mean over (B, N) finished in glue
    return out, div_loss


# ---------------------------------------------------------------------------
# Pure-JAX references (f32, PyTorch semantics) for sanity checking
# ---------------------------------------------------------------------------
def ref_noattn(seq, adj, w_fc, bias, alpha_act):
    seq_fts = seq @ w_fc.T
    out = jnp.einsum("bnm,bmf->bnf", adj, seq_fts) + bias
    return jnp.where(out > 0, out, alpha_act * out)


def ref_attn(seq, adj, drop_mask, w_fc, w_q, w_k, w_v1, w_v2,
             bias, alpha_act, alpha_v):
    seq_fts = seq @ w_fc.T
    h = jnp.einsum("bnm,bmf->bnf", adj, seq_fts)
    q = h @ w_q.T
    k = h @ w_k.T
    qn = q / jnp.maximum(jnp.linalg.norm(q, axis=-1, keepdims=True), 1e-12)
    kn = k / jnp.maximum(jnp.linalg.norm(k, axis=-1, keepdims=True), 1e-12)
    attn_mx = jnp.einsum("bmd,bnd->bmn", qn, kn)
    div_loss = jnp.mean(jnp.sum((qn - kn) ** 2, axis=-1))
    att = jnp.where(adj > 0, attn_mx, -9e15)
    att = jax.nn.softmax(att, axis=-1)
    att = att * drop_mask
    ctx = jnp.einsum("bmn,bnf->bmf", att, h)
    v1 = ctx @ w_v1.T
    v1 = jnp.where(v1 > 0, v1, alpha_v * v1)
    out = v1 @ w_v2.T + bias
    return jnp.where(out > 0, out, alpha_act * out), div_loss


# ---------------------------------------------------------------------------
# Deterministic parameter init (nn.Linear xavier_uniform_, PReLU=0.25, bias=0)
# ---------------------------------------------------------------------------
def xavier_uniform(key, out_f, in_f):
    bound = float(np.sqrt(6.0 / (in_f + out_f)))
    return jax.random.uniform(key, (out_f, in_f), jnp.float32, -bound, bound)


if __name__ == "__main__":
    B, N, IN_FT, OUT_FT = 2, 8, 16, 32

    key = jax.random.PRNGKey(0)
    ks = jax.random.split(key, 10)

    seq = jax.random.normal(ks[0], (B, N, IN_FT), jnp.float32)
    u = jax.random.uniform(ks[1], (B, N, N), jnp.float32)
    adj = jnp.where(u > 0.4, u, 0.0)                 # sparse-ish positive adjacency

    w_fc = xavier_uniform(ks[2], OUT_FT, IN_FT)
    w_q = xavier_uniform(ks[3], OUT_FT, OUT_FT)
    w_k = xavier_uniform(ks[4], OUT_FT, OUT_FT)
    w_v1 = xavier_uniform(ks[5], OUT_FT, OUT_FT)
    w_v2 = xavier_uniform(ks[6], OUT_FT, OUT_FT)
    bias = jnp.zeros((OUT_FT,), jnp.float32)
    alpha_act = jnp.float32(0.25)                    # nn.PReLU default
    alpha_v = jnp.float32(0.25)

    # F.dropout(p=0.1, training=True): keep-mask generated in glue (JAX RNG),
    # scaled by 1/(1-p), applied elementwise inside the kernel.
    p = 0.1
    keep = (jax.random.uniform(ks[7], (B, N, N)) >= p).astype(jnp.float32)
    drop_mask = keep / (1.0 - p)

    ref_plain = ref_noattn(seq, adj, w_fc, bias, alpha_act)
    ref_out, ref_div = ref_attn(seq, adj, drop_mask, w_fc, w_q, w_k, w_v1, w_v2,
                                bias, alpha_act, alpha_v)

    # f32 MXU operands -> tight tolerance; bf16 MXU operands (v5e/v6e/v7x
    # native) -> looser tolerance for the 8-matmul-deep dependent chain.
    for mxu_dtype, rtol, atol in ((jnp.float32, 2e-2, 2e-2),
                                  (jnp.bfloat16, 1e-1, 1e-1)):
        # --- attn=False path ---
        out_plain = gcn_forward_noattn(seq, adj, w_fc, bias, alpha_act,
                                       mxu_dtype=mxu_dtype)
        out_plain = jax.block_until_ready(out_plain)
        np.testing.assert_allclose(np.asarray(out_plain), np.asarray(ref_plain),
                                   rtol=rtol, atol=atol)

        # --- attn=True path ---
        out_attn, div_loss = gcn_forward_attn(
            seq, adj, drop_mask, w_fc, w_q, w_k, w_v1, w_v2,
            bias, alpha_act, alpha_v, mxu_dtype=mxu_dtype)
        out_attn = jax.block_until_ready(out_attn)
        div_loss = jax.block_until_ready(div_loss)
        np.testing.assert_allclose(np.asarray(out_attn), np.asarray(ref_out),
                                   rtol=rtol, atol=atol)
        np.testing.assert_allclose(float(div_loss), float(ref_div),
                                   rtol=rtol, atol=atol)

    print("KERNEL_OK")
</pallas_src>

<mosaic_0001>
module attributes {stable_mosaic.version = 11 : i64} {
  func.func @gcn_noattn_kernel(%arg0: memref<16x16xf32, #tpu.memory_space<vmem>>, %arg1: memref<2x8x8xf32, #tpu.memory_space<vmem>>, %arg2: memref<16x128xf32, #tpu.memory_space<vmem>>, %arg3: memref<1x128xf32, #tpu.memory_space<vmem>>, %arg4: memref<1xf32, #tpu.memory_space<smem>>, %arg5: memref<16x128xf32, #tpu.memory_space<vmem>>) attributes {dimension_semantics = [], scalar_prefetch = 0 : i64, scratch_operands = 0 : i64, tpu.core_type = #tpu.core_type<tc>} {
    %c0 = arith.constant 0 : index
    %0 = memref.load %arg4[%c0] : memref<1xf32, #tpu.memory_space<smem>>
    %c0_0 = arith.constant 0 : index
    %c0_1 = arith.constant 0 : index
    %1 = vector.load %arg3[%c0_0, %c0_1] : memref<1x128xf32, #tpu.memory_space<vmem>>, vector<1x128xf32>
    %c0_2 = arith.constant 0 : index
    %c0_3 = arith.constant 0 : index
    %2 = vector.load %arg0[%c0_2, %c0_3] : memref<16x16xf32, #tpu.memory_space<vmem>>, vector<16x16xf32>
    %c0_4 = arith.constant 0 : index
    %c0_5 = arith.constant 0 : index
    %3 = vector.load %arg2[%c0_4, %c0_5] : memref<16x128xf32, #tpu.memory_space<vmem>>, vector<16x128xf32>
    %cst = arith.constant dense<0.000000e+00> : vector<16x128xf32>
    %4 = tpu.matmul %2, %3, %cst {dimension_numbers = #tpu.dot_dimension_numbers<[1], [0], [0], [1], [0, 0, 1, 1], [], []>} : vector<16x16xf32>, vector<16x128xf32>, vector<16x128xf32> -> vector<16x128xf32>
    %5 = vector.extract_strided_slice %4 {offsets = [0, 0], sizes = [8, 128], strides = [1, 1]} : vector<16x128xf32> to vector<8x128xf32>
    %c0_6 = arith.constant 0 : index
    %c0_7 = arith.constant 0 : index
    %c0_8 = arith.constant 0 : index
    %6 = vector.load %arg1[%c0_6, %c0_7, %c0_8] : memref<2x8x8xf32, #tpu.memory_space<vmem>>, vector<1x8x8xf32>
    %7 = vector.shape_cast %6 : vector<1x8x8xf32> to vector<8x8xf32>
    %cst_9 = arith.constant dense<0.000000e+00> : vector<8x128xf32>
    %8 = tpu.matmul %7, %5, %cst_9 {dimension_numbers = #tpu.dot_dimension_numbers<[1], [0], [0], [1], [0, 0, 1, 1], [], []>} : vector<8x8xf32>, vector<8x128xf32>, vector<8x128xf32> -> vector<8x128xf32>
    %9 = vector.broadcast %1 : vector<1x128xf32> to vector<8x128xf32>
    %10 = arith.addf %8, %9 : vector<8x128xf32>
    %cst_10 = arith.constant 0.000000e+00 : f32
    %11 = vector.broadcast %cst_10 : f32 to vector<8x128xf32>
    %12 = arith.cmpf ogt, %10, %11 : vector<8x128xf32>
    %13 = vector.broadcast %0 : f32 to vector<8x128xf32>
    %14 = arith.mulf %13, %10 : vector<8x128xf32>
    %15 = arith.select %12, %10, %14 : vector<8x128xi1>, vector<8x128xf32>
    %c0_11 = arith.constant 0 : index
    %c0_12 = arith.constant 0 : index
    %16 = vector.load %arg5[%c0_11, %c0_12] : memref<16x128xf32, #tpu.memory_space<vmem>>, vector<8x128xf32>
    tpu.vector_store %arg5[%c0_11, %c0_12], %15 {strides = array<i32>} : memref<16x128xf32, #tpu.memory_space<vmem>>, vector<8x128xf32>,
    %17 = vector.extract_strided_slice %4 {offsets = [8, 0], sizes = [8, 128], strides = [1, 1]} : vector<16x128xf32> to vector<8x128xf32>
    %c1 = arith.constant 1 : index
    %c0_13 = arith.constant 0 : index
    %c0_14 = arith.constant 0 : index
    %18 = vector.load %arg1[%c1, %c0_13, %c0_14] : memref<2x8x8xf32, #tpu.memory_space<vmem>>, vector<1x8x8xf32>
    %19 = vector.shape_cast %18 : vector<1x8x8xf32> to vector<8x8xf32>
    %cst_15 = arith.constant dense<0.000000e+00> : vector<8x128xf32>
    %20 = tpu.matmul %19, %17, %cst_15 {dimension_numbers = #tpu.dot_dimension_numbers<[1], [0], [0], [1], [0, 0, 1, 1], [], []>} : vector<8x8xf32>, vector<8x128xf32>, vector<8x128xf32> -> vector<8x128xf32>
    %21 = vector.broadcast %1 : vector<1x128xf32> to vector<8x128xf32>
    %22 = arith.addf %20, %21 : vector<8x128xf32>
    %cst_16 = arith.constant 0.000000e+00 : f32
    %23 = vector.broadcast %cst_16 : f32 to vector<8x128xf32>
    %24 = arith.cmpf ogt, %22, %23 : vector<8x128xf32>
    %25 = vector.broadcast %0 : f32 to vector<8x128xf32>
    %26 = arith.mulf %25, %22 : vector<8x128xf32>
    %27 = arith.select %24, %22, %26 : vector<8x128xi1>, vector<8x128xf32>
    %c8 = arith.constant 8 : index
    %c0_17 = arith.constant 0 : index
    %28 = vector.load %arg5[%c8, %c0_17] : memref<16x128xf32, #tpu.memory_space<vmem>>, vector<8x128xf32>
    tpu.vector_store %arg5[%c8, %c0_17], %27 {strides = array<i32>} : memref<16x128xf32, #tpu.memory_space<vmem>>, vector<8x128xf32>,
    return
  }
}

</mosaic_0001>

<llo_original>
// kernel: tpu_custom_call.1
$region0: #{tpu_custom_call.1}
  #allocation0 [shape = 'u32[]', space=smem, size = 0x4, offset = 0x4, fixed_abs, tag = 'smem constant byte address 0x4 - core index']
  #allocation1 [shape = 'u32[72,128]{1,0:T(1,128)}', space=vmem, size = 0x9000, scoped, tag = 'internal scratch']
  #allocation2 [shape = 'f32[1]{0:T(128)S(6)}', space=smem, size = 0x200, scoped, tag = 'scoped memory for tpu_custom_call.1']
  %s0 = inlined_call_operand.hbm [shape: f32[16,16], index: 0, kind: input, shape index: {}]
  %s1 = inlined_call_operand.hbm [shape: f32[2,8,8], index: 1, kind: input, shape index: {}]
  %s2 = inlined_call_operand.hbm [shape: f32[16,128], index: 2, kind: input, shape index: {}]
  %s3 = inlined_call_operand.vmem [shape: f32[1,128], index: 3, kind: input, shape index: {}]
  %s4 = inlined_call_operand.<no memory space> [shape: f32[1], index: 4, kind: input, shape index: {}]
  %s5 = inlined_call_operand.hbm [shape: f32[16,128], index: 5, kind: output, shape index: {}]
  %s6 = sld [smem:[#allocation0]]
  $region42: #{tpu_custom_call.1} parent=0
    _
  %s8 = ssub.s32 1, %s6
  %s9 = scalar_select 0, %s8, %s6
  %10 = sst [smem:[#allocation2]] %s4
  $region1: #{tpu_custom_call.1} parent=0
    #allocation3 [shape = 'u8[8192]{0}', space=vmem, size = 0x2000, scoped, tag = 'input window, operand 0, single buffered']
    #allocation4 [shape = 's32[1]{0}', space=sflag, size = 0x4, scoped, tag = 'scoped memory for tpu_custom_call.1']
    #allocation5 [shape = 's32[1]{0}', space=sflag, size = 0x4, scoped, tag = 'scoped memory for tpu_custom_call.1']
    #allocation6 [shape = 'u8[8192]{0}', space=vmem, size = 0x2000, scoped, tag = 'input window, operand 1, single buffered']
    #allocation7 [shape = 's32[1]{0}', space=sflag, size = 0x4, scoped, tag = 'scoped memory for tpu_custom_call.1']
    #allocation8 [shape = 'u8[8192]{0}', space=vmem, size = 0x2000, scoped, tag = 'input window, operand 2, single buffered']
    #allocation9 [shape = 'u8[8192]{0}', space=vmem, size = 0x2000, scoped, tag = 'output window, operand 0, single buffered']
    %11 = vsyncpa [#allocation4], 0
    %12 = vsyncpa [#allocation7], 0
    %13 = vsyncpa [#allocation5], 0
    // Predicated region
    $region2: #{tpu_custom_call.1} parent=1 // pred_check
      _
    $region3: #{tpu_custom_call.1} parent=1 // pred_check_branch
      %15 = sbr.rel (0) target = $region5
    $region4: #{tpu_custom_call.1} parent=1 // pred_region
      %17 = vsyncadd [#allocation4], 0
      %s18 = sshll.u32 %s0, 4
      %s19 = int_to_ptr.hbm [resolvable:$true] %s18
      %s20 = sshll.u32 [#allocation3], 4
      %s21 = int_to_ptr.vmem [resolvable:$true] %s20
      %26 = dma.hbm_to_vmem [thread:$0]  %s19, 256, %s21, [#allocation4], 128, 128, 8
    $region5: #{tpu_custom_call.1} parent=1 // pred_fallthru
      _
    // Predicated region
    $region6: #{tpu_custom_call.1} parent=1 // pred_check
      _
    $region7: #{tpu_custom_call.1} parent=1 // pred_check_branch
      %28 = sbr.rel (0) target = $region9
    $region8: #{tpu_custom_call.1} parent=1 // pred_region
      %30 = vsyncadd [#allocation7], 0
      %s31 = sshll.u32 %s1, 4
      %s32 = int_to_ptr.hbm [resolvable:$true] %s31
      %s33 = sshll.u32 [#allocation6], 4
      %s34 = int_to_ptr.vmem [resolvable:$true] %s33
      %39 = dma.hbm_to_vmem [thread:$0]  %s32, 256, %s34, [#allocation7], 128, 128, 8
    $region9: #{tpu_custom_call.1} parent=1 // pred_fallthru
      _
    // Predicated region
    $region10: #{tpu_custom_call.1} parent=1 // pred_check
      _
    $region11: #{tpu_custom_call.1} parent=1 // pred_check_branch
      %41 = sbr.rel (0) target = $region13
    $region12: #{tpu_custom_call.1} parent=1 // pred_region
      %43 = vsyncadd [#allocation7], 0
      %s44 = sshll.u32 %s2, 4
      %s45 = int_to_ptr.hbm [resolvable:$true] %s44
      %s46 = sshll.u32 [#allocation8], 4
      %s47 = int_to_ptr.vmem [resolvable:$true] %s46
      %52 = dma.hbm_to_vmem [thread:$0]  %s45, 256, %s47, [#allocation7], 128, 128, 8
    $region13: #{tpu_custom_call.1} parent=1 // pred_fallthru
      _
    // Predicated region
    $region14: #{tpu_custom_call.1} parent=1 // pred_check
      _
    $region15: #{tpu_custom_call.1} parent=1 // pred_check_branch
      %54 = sbr.rel (0) target = $region17
    $region16: #{tpu_custom_call.1} parent=1 // pred_region
      _
    $region17: #{tpu_custom_call.1} parent=1 // pred_fallthru
      _
    // Predicated region
    $region18: #{tpu_custom_call.1} parent=1 // pred_check
      _
    $region19: #{tpu_custom_call.1} parent=1 // pred_check_branch
      %56 = sbr.rel (0) target = $region21
    $region20: #{tpu_custom_call.1} parent=1 // pred_region
      _
    $region21: #{tpu_custom_call.1} parent=1 // pred_fallthru
      _
    // Predicated region
    $region22: #{tpu_custom_call.1} parent=1 // pred_check
      _
    $region23: #{tpu_custom_call.1} parent=1 // pred_check_branch
      %58 = sbr.rel (0) target = $region25
    $region24: #{tpu_custom_call.1} parent=1 // pred_region
      %60 = dma.done [#allocation4], 256
    $region25: #{tpu_custom_call.1} parent=1 // pred_fallthru
      _
    // Predicated region
    $region26: #{tpu_custom_call.1} parent=1 // pred_check
      _
    $region27: #{tpu_custom_call.1} parent=1 // pred_check_branch
      %62 = sbr.rel (0) target = $region29
    $region28: #{tpu_custom_call.1} parent=1 // pred_region
      %64 = dma.done [#allocation7], 256
    $region29: #{tpu_custom_call.1} parent=1 // pred_fallthru
      _
    // Predicated region
    $region30: #{tpu_custom_call.1} parent=1 // pred_check
      _
    $region31: #{tpu_custom_call.1} parent=1 // pred_check_branch
      %66 = sbr.rel (0) target = $region33
    $region32: #{tpu_custom_call.1} parent=1 // pred_region
      %68 = dma.done [#allocation7], 256
    $region33: #{tpu_custom_call.1} parent=1 // pred_fallthru
      _
    %s69 = sld [smem:[#allocation2]]
    %v70 = vld [vmem:[%s3] sm:$0x1]
    %v71 = vld [vmem:[#allocation3] sm:$0xff]
    %v72 = vld [vmem:[#allocation3 + $0x8] sm:$0xff]
    %v73 = vld [vmem:[#allocation8] sm:$0xff]
    %v74 = vld [vmem:[#allocation8 + $0x8] sm:$0xff]
    %vm75 = vcmask 130048
    %v77 = vsel %vm75, %v71, 0
    %v80 = vsel %vm75, %v72, 0
    %82 = vmatpush.msra.mxu0 0.0
    %83 = vmatpush.msra.mxu0 0.0
    %84 = vmatpush.msra.mxu0 0.0
    %85 = vmatpush.msra.mxu0 0.0
    %86 = vmatpush.msra.mxu0 0.0
    %87 = vmatpush.msra.mxu0 0.0
    %88 = vmatpush.msra.mxu0 0.0
    %89 = vmatpush.msra.mxu0 0.0
    %90 = vmatpush.msra.mxu0 0.0
    %91 = vmatpush.msra.mxu0 0.0
    %92 = vmatpush.msra.mxu0 0.0
    %93 = vmatpush.msra.mxu0 0.0
    %94 = vmatpush.msra.mxu0 0.0
    %95 = vmatpush.msra.mxu0 0.0
    %96 = vmatpush.msra.mxu0 %v74
    %97 = vmatpush.msra.mxu0 %v73
    %98 = vmatmul.f32.gmra.mxu0 %v77
    %v99 = vpop.f32.mrf.mxu0
    %v100 = vadd.f32 0.0, %v99
    %101 = vmatmul.f32.gmra.mxu0 %v80
    %v102 = vpop.f32.mrf.mxu0
    %v103 = vadd.f32 0.0, %v102
    %104 = vdwg.mxu0
    %v105 = vld [vmem:[#allocation6] sm:$0xff]
    %v107 = vperm.slane %v70, 0
    %vm109 = vcmask 64512
    %v111 = vsel %vm109, %v105, 0
    %113 = vmatpush.msra.mxu0 0.0
    %114 = vmatpush.msra.mxu0 0.0
    %115 = vmatpush.msra.mxu0 0.0
    %116 = vmatpush.msra.mxu0 0.0
    %117 = vmatpush.msra.mxu0 0.0
    %118 = vmatpush.msra.mxu0 0.0
    %119 = vmatpush.msra.mxu0 0.0
    %120 = vmatpush.msra.mxu0 0.0
    %121 = vmatpush.msra.mxu0 0.0
    %122 = vmatpush.msra.mxu0 0.0
    %123 = vmatpush.msra.mxu0 0.0
    %124 = vmatpush.msra.mxu0 0.0
    %125 = vmatpush.msra.mxu0 0.0
    %126 = vmatpush.msra.mxu0 0.0
    %127 = vmatpush.msra.mxu0 0.0
    %128 = vmatpush.msra.mxu0 %v100
    %129 = vmatmul.f32.gmra.mxu0 %v111
    %v130 = vpop.f32.mrf.mxu0
    %v131 = vadd.f32 %v107, %v130
    %132 = vdwg.mxu0
    %vm133 = vcmp.gt.f32.partialorder %v131, 0.0
    %v134 = vstv %s69
    %v135 = vmul.f32 %v134, %v131
    %v136 = vsel %vm133, %v131, %v135
    %137 = vst [vmem:[#allocation9] sm:$0xff] %v136
    %s138 = scalar_lea.vmem [#allocation6], 8
    %v139 = vld [vmem:[%s138] sm:$0xff]
    %v141 = vsel %vm109, %v139, 0
    %143 = vmatpush.msra.mxu0 0.0
    %144 = vmatpush.msra.mxu0 0.0
    %145 = vmatpush.msra.mxu0 0.0
    %146 = vmatpush.msra.mxu0 0.0
    %147 = vmatpush.msra.mxu0 0.0
    %148 = vmatpush.msra.mxu0 0.0
    %149 = vmatpush.msra.mxu0 0.0
    %150 = vmatpush.msra.mxu0 0.0
    %151 = vmatpush.msra.mxu0 0.0
    %152 = vmatpush.msra.mxu0 0.0
    %153 = vmatpush.msra.mxu0 0.0
    %154 = vmatpush.msra.mxu0 0.0
    %155 = vmatpush.msra.mxu0 0.0
    %156 = vmatpush.msra.mxu0 0.0
    %157 = vmatpush.msra.mxu0 0.0
    %158 = vmatpush.msra.mxu0 %v103
    %159 = vmatmul.f32.gmra.mxu0 %v141
    %v160 = vpop.f32.mrf.mxu0
    %v161 = vadd.f32 %v107, %v160
    %162 = vdwg.mxu0
    %vm163 = vcmp.gt.f32.partialorder %v161, 0.0
    %v164 = vmul.f32 %v134, %v161
    %v165 = vsel %vm163, %v161, %v164
    %166 = vst [vmem:[#allocation9 + $0x8] sm:$0xff] %v165
    // Predicated region
    $region34: #{tpu_custom_call.1} parent=1 // pred_check
      _
    $region35: #{tpu_custom_call.1} parent=1 // pred_check_branch
      %168 = sbr.rel (0) target = $region37
    $region36: #{tpu_custom_call.1} parent=1 // pred_region
      %170 = vsyncadd [#allocation5], 0
      %s171 = sshll.u32 [#allocation9], 4
      %s172 = int_to_ptr.vmem [resolvable:$true] %s171
      %s173 = sshll.u32 %s5, 4
      %s174 = int_to_ptr.hbm [resolvable:$true] %s173
      %179 = dma.vmem_to_hbm [thread:$0]  %s172, 256, %s174, [#allocation5], 128, 128, 8
    $region37: #{tpu_custom_call.1} parent=1 // pred_fallthru
      _
    // Predicated region
    $region38: #{tpu_custom_call.1} parent=1 // pred_check
      _
    $region39: #{tpu_custom_call.1} parent=1 // pred_check_branch
      %181 = sbr.rel (0) target = $region41
    $region40: #{tpu_custom_call.1} parent=1 // pred_region
      %183 = dma.done [#allocation5], 256
    $region41: #{tpu_custom_call.1} parent=1 // pred_fallthru
      _
    %184 = vsyncpa [#allocation4], 1
    %185 = vsyncpa [#allocation7], 1
    %186 = vsyncpa [#allocation5], 1

</llo_original>
